<compile_context>
chip_gen: v7x
topology: tpu7x:2x2x1
jax: 0.10.0
libtpu: 0.0.40
codegen_flags: <defaults>
</compile_context>

<pallas_src>
import functools
import math

import jax
import jax.numpy as jnp
from jax import lax
from jax.experimental import pallas as pl
from jax.experimental.pallas import tpu as pltpu


def _sinpos_kernel(x_ref, base_ref, freq_ref, phase_ref, expand_ref,
                   o_ref, sin_ref, *, padding_idx, k, rows_tile, row_width):
    # x_ref:      (1, rows_tile, k)          int32 token ids (k timesteps per packed row)
    # base_ref:   (1, row_width)             f32: slot_index(lane) + padding_idx + 1
    # freq_ref:   (1, row_width)             f32: inv_freq tiled k times (0 in odd trailing col)
    # phase_ref:  (1, row_width)             f32: 0 for sin half, pi/2 for cos half
    # expand_ref: (k, row_width)             f32: block-diagonal ones (mask lane-expansion)
    # o_ref:      (1, rows_tile, row_width)  f32 output tile
    # sin_ref:    (rows_tile, row_width)     f32 scratch, reused across the batch axis
    r = pl.program_id(0)
    b = pl.program_id(1)

    # Build the phase-shifted sin tile once per row block and reuse it for every batch
    # element (cuts EUP transcendental work by Bx; important on v7x where HBM is fast).
    @pl.when(b == 0)
    def _():
        sub = lax.broadcasted_iota(jnp.int32, (rows_tile, row_width), 0)
        row0 = r * rows_tile
        # pos = t + padding_idx + 1, with t = (row0 + sub) * k + slot(lane); exact ints in f32.
        pos = ((sub + row0) * k).astype(jnp.float32) + base_ref[...]
        ang = pos * freq_ref[...] + phase_ref[...]
        sin_ref[...] = jnp.sin(ang)

    # Per-batch padding mask, expanded from k timesteps/row to k*embed_dim lanes with a tiny
    # block-diagonal matmul (exact for {0,1} values; MXU is otherwise idle).
    maskf = (x_ref[0] != padding_idx).astype(jnp.float32)              # (rows_tile, k)
    if k == 1:
        mask_wide = maskf                                              # broadcasts over lanes
    else:
        mask_wide = jnp.dot(maskf, expand_ref[...],
                            preferred_element_type=jnp.float32)        # (rows_tile, row_width)

    # Padding tokens (and the odd trailing zero column, where ang == 0) end up exactly 0.
    o_ref[0] = sin_ref[...] * mask_wide


def sinusoidal_positional_embedding(x, embed_dim, padding_idx):
    """x: (B, T) integer ids. Returns (B, T, embed_dim) float32 embeddings."""
    B, T = x.shape
    half = embed_dim // 2
    assert half >= 2, "embed_dim must be >= 4 (matches the PyTorch module's formula)"

    def _round_up(a, m):
        return -(-a // m) * m

    # ---- lane-dense packing: k timesteps per output row so the stored last dim is a
    #      multiple of 128 lanes. ----
    k = 128 // math.gcd(embed_dim, 128)
    row_width = k * embed_dim                                # multiple of 128

    # ---- byte-budgeted row tile: (output row + lane-padded x row) * rows ~<= 4 MiB,
    #      rows a multiple of 8. ----
    TARGET_TILE_BYTES = 4 * 1024 * 1024
    bytes_per_row = row_width * 4 + 128 * 4
    rows_budget = max(8, (TARGET_TILE_BYTES // bytes_per_row) // 8 * 8)

    rows_needed = _round_up(-(-T // k), 8)                   # cdiv(T, k) rounded up to 8
    if rows_needed <= rows_budget:
        rows_tile = rows_needed
        rows_total = rows_needed
    else:
        rows_tile = rows_budget
        rows_total = _round_up(rows_needed, rows_tile)
    grid_rows = rows_total // rows_tile

    # v7x has 2 TensorCores: give the "parallel" axis >= 2 blocks when B can't provide work.
    if grid_rows == 1 and B == 1 and rows_needed >= 16:
        rows_tile = max(8, _round_up(rows_needed // 2, 8))
        rows_total = _round_up(rows_needed, rows_tile)
        grid_rows = rows_total // rows_tile

    T_pad = rows_total * k
    x_pad = x.astype(jnp.int32)
    if T_pad != T:
        x_pad = jnp.pad(x_pad, ((0, 0), (0, T_pad - T)), constant_values=padding_idx)
    x_packed = x_pad.reshape(B, rows_total, k)

    # ---- trace-time constants (tiny) ----
    scale = math.log(10000.0) / (half - 1)
    inv_freq = jnp.exp(jnp.arange(half, dtype=jnp.float32) * (-scale))
    pad_col = [jnp.zeros((1,), jnp.float32)] if embed_dim % 2 else []
    inv_freq_full = jnp.concatenate([inv_freq, inv_freq] + pad_col)      # (embed_dim,)
    phase_full = jnp.concatenate(
        [jnp.zeros((half,), jnp.float32),
         jnp.full((half,), math.pi / 2.0, jnp.float32)] + pad_col)       # (embed_dim,)
    freq_row = jnp.tile(inv_freq_full, k).reshape(1, row_width)
    phase_row = jnp.tile(phase_full, k).reshape(1, row_width)
    base_row = (jnp.repeat(jnp.arange(k, dtype=jnp.float32), embed_dim)
                + float(padding_idx + 1)).reshape(1, row_width)
    expand_ones = jnp.repeat(jnp.eye(k, dtype=jnp.float32), embed_dim, axis=1)  # (k, row_width)

    kernel = functools.partial(
        _sinpos_kernel, padding_idx=padding_idx, k=k,
        rows_tile=rows_tile, row_width=row_width)

    # ---- explicit VMEM budget: double-buffered x & out tiles + resident sin scratch +
    #      constants, valid for v5e (16 MiB default scoped) and v7x (64 MiB physical). ----
    out_tile_b = rows_tile * row_width * 4
    x_tile_b = rows_tile * 128 * 4                          # k lanes pad to 128 in VMEM
    const_b = (3 * 8 + max(k, 8)) * row_width * 4
    vmem_limit = 2 * (out_tile_b + x_tile_b) + out_tile_b + 2 * const_b + (4 << 20)
    vmem_limit = int(min(max(vmem_limit, 16 << 20), 64 << 20))

    cost = pl.CostEstimate(
        flops=B * rows_total * row_width * (2 * k + 2) + rows_total * row_width * 6,
        transcendentals=rows_total * row_width,              # sin computed once per row block
        bytes_accessed=B * T_pad * 4 + B * rows_total * row_width * 4,
    )

    out_packed = pl.pallas_call(
        kernel,
        out_shape=jax.ShapeDtypeStruct((B, rows_total, row_width), jnp.float32),
        grid_spec=pltpu.PrefetchScalarGridSpec(
            num_scalar_prefetch=0,
            grid=(grid_rows, B),                             # B innermost -> sin-tile reuse
            in_specs=[
                pl.BlockSpec((1, rows_tile, k), lambda r, b: (b, r, 0)),
                pl.BlockSpec((1, row_width), lambda r, b: (0, 0)),
                pl.BlockSpec((1, row_width), lambda r, b: (0, 0)),
                pl.BlockSpec((1, row_width), lambda r, b: (0, 0)),
                pl.BlockSpec((k, row_width), lambda r, b: (0, 0)),
            ],
            out_specs=pl.BlockSpec((1, rows_tile, row_width), lambda r, b: (b, r, 0)),
            scratch_shapes=[pltpu.VMEM((rows_tile, row_width), jnp.float32)],
        ),
        compiler_params=pltpu.CompilerParams(
            dimension_semantics=("parallel", "arbitrary"),
            vmem_limit_bytes=vmem_limit),
        cost_estimate=cost,
    )(x_packed, base_row, freq_row, phase_row, expand_ones)

    out = out_packed.reshape(B, T_pad, embed_dim)[:, :T, :]
    # Mirror the PyTorch .detach()
    return lax.stop_gradient(out)


def sinusoidal_positional_embedding_ref(x, embed_dim, padding_idx):
    """Pure-jnp reference mirroring the PyTorch module (table build + gather)."""
    B, T = x.shape
    max_pos = padding_idx + 1 + T
    half = embed_dim // 2
    scale = math.log(10000.0) / (half - 1)
    inv_freq = jnp.exp(jnp.arange(half, dtype=jnp.float32) * (-scale))
    ang = jnp.arange(max_pos, dtype=jnp.float32)[:, None] * inv_freq[None, :]
    weights = jnp.concatenate([jnp.sin(ang), jnp.cos(ang)], axis=1)
    if embed_dim % 2 == 1:
        weights = jnp.concatenate([weights, jnp.zeros((max_pos, 1), jnp.float32)], axis=1)
    weights = weights.at[padding_idx].set(0.0)

    mask = x != padding_idx
    t = jnp.arange(T, dtype=jnp.int32)[None, :]
    positions = jnp.where(mask, t + padding_idx + 1, padding_idx)
    return weights[positions.reshape(-1)].reshape(B, T, embed_dim)


if __name__ == "__main__":
    EMBED_DIM = 32
    PADDING_IDX = 1
    B, T = 2, 16

    key = jax.random.PRNGKey(0)
    x = jax.random.randint(key, (B, T), 0, 12, dtype=jnp.int32)
    # Force a few padding tokens to exercise the mask / zero-row path.
    x = x.at[0, 3].set(PADDING_IDX).at[1, 0].set(PADDING_IDX).at[1, 7].set(PADDING_IDX)

    out = sinusoidal_positional_embedding(x, EMBED_DIM, PADDING_IDX)
    out = jax.block_until_ready(out)

    ref = sinusoidal_positional_embedding_ref(x, EMBED_DIM, PADDING_IDX)
    assert out.shape == (B, T, EMBED_DIM), out.shape
    assert jnp.allclose(out, ref, atol=1e-5, rtol=1e-5), "mismatch vs reference"

    print("KERNEL_OK")
</pallas_src>

<mosaic_0001>
module attributes {stable_mosaic.version = 11 : i64} {
  func.func @_sinpos_kernel(%arg0: i32, %arg1: i32, %arg2: memref<1x8x4xi32, #tpu.memory_space<vmem>>, %arg3: memref<1x128xf32, #tpu.memory_space<vmem>>, %arg4: memref<1x128xf32, #tpu.memory_space<vmem>>, %arg5: memref<1x128xf32, #tpu.memory_space<vmem>>, %arg6: memref<4x128xf32, #tpu.memory_space<vmem>>, %arg7: memref<1x8x128xf32, #tpu.memory_space<vmem>>, %arg8: memref<8x128xf32, #tpu.memory_space<vmem>>) attributes {dimension_semantics = [#tpu.dimension_semantics<parallel>, #tpu.dimension_semantics<arbitrary>], iteration_bounds = array<i64: 1, 2>, scalar_prefetch = 0 : i64, scratch_operands = 1 : i64, tpu.core_type = #tpu.core_type<tc>, window_params = [{transform_indices = @transform_0, window_bounds = array<i64: 1, 8, 4>}, {pipeline_mode = #tpu.pipeline_mode<synchronous>, transform_indices = @transform_1, window_bounds = array<i64: 1, 128>}, {pipeline_mode = #tpu.pipeline_mode<synchronous>, transform_indices = @transform_2, window_bounds = array<i64: 1, 128>}, {pipeline_mode = #tpu.pipeline_mode<synchronous>, transform_indices = @transform_3, window_bounds = array<i64: 1, 128>}, {pipeline_mode = #tpu.pipeline_mode<synchronous>, transform_indices = @transform_4, window_bounds = array<i64: 4, 128>}, {transform_indices = @transform_5, window_bounds = array<i64: 1, 8, 128>}]} {
    %c0_i32 = arith.constant 0 : i32
    %0 = arith.cmpi eq, %arg1, %c0_i32 : i32
    %1 = arith.extui %0 : i1 to i32
    %c0_i32_0 = arith.constant 0 : i32
    %2 = arith.cmpi ne, %1, %c0_i32_0 : i32
    scf.if %2 {
      %16 = tpu.iota {dimensions = array<i32: 0>} : vector<8x128xi32>
      %c8_i32 = arith.constant 8 : i32
      %17 = arith.muli %arg0, %c8_i32 : i32
      %18 = vector.broadcast %17 : i32 to vector<8x128xi32>
      %19 = arith.addi %16, %18 : vector<8x128xi32>
      %c4_i32 = arith.constant 4 : i32
      %20 = vector.broadcast %c4_i32 : i32 to vector<8x128xi32>
      %21 = arith.muli %19, %20 : vector<8x128xi32>
      %22 = arith.sitofp %21 : vector<8x128xi32> to vector<8x128xf32>
      %c0_10 = arith.constant 0 : index
      %c0_11 = arith.constant 0 : index
      %23 = vector.load %arg3[%c0_10, %c0_11] : memref<1x128xf32, #tpu.memory_space<vmem>>, vector<1x128xf32>
      %24 = vector.broadcast %23 : vector<1x128xf32> to vector<8x128xf32>
      %25 = arith.addf %22, %24 : vector<8x128xf32>
      %c0_12 = arith.constant 0 : index
      %c0_13 = arith.constant 0 : index
      %26 = vector.load %arg4[%c0_12, %c0_13] : memref<1x128xf32, #tpu.memory_space<vmem>>, vector<1x128xf32>
      %27 = vector.broadcast %26 : vector<1x128xf32> to vector<8x128xf32>
      %28 = arith.mulf %25, %27 : vector<8x128xf32>
      %c0_14 = arith.constant 0 : index
      %c0_15 = arith.constant 0 : index
      %29 = vector.load %arg5[%c0_14, %c0_15] : memref<1x128xf32, #tpu.memory_space<vmem>>, vector<1x128xf32>
      %30 = vector.broadcast %29 : vector<1x128xf32> to vector<8x128xf32>
      %31 = arith.addf %28, %30 : vector<8x128xf32>
      %32 = math.sin %31 : vector<8x128xf32>
      %c0_16 = arith.constant 0 : index
      %c0_17 = arith.constant 0 : index
      %33 = vector.load %arg8[%c0_16, %c0_17] : memref<8x128xf32, #tpu.memory_space<vmem>>, vector<8x128xf32>
      tpu.vector_store %arg8[%c0_16, %c0_17], %32 {strides = array<i32>} : memref<8x128xf32, #tpu.memory_space<vmem>>, vector<8x128xf32>,
    } else {
    }
    %c0 = arith.constant 0 : index
    %c0_1 = arith.constant 0 : index
    %c0_2 = arith.constant 0 : index
    %3 = vector.load %arg2[%c0, %c0_1, %c0_2] : memref<1x8x4xi32, #tpu.memory_space<vmem>>, vector<1x8x4xi32>
    %4 = vector.shape_cast %3 : vector<1x8x4xi32> to vector<8x4xi32>
    %c1_i32 = arith.constant 1 : i32
    %5 = vector.broadcast %c1_i32 : i32 to vector<8x4xi32>
    %6 = arith.cmpi ne, %4, %5 : vector<8x4xi32>
    %7 = arith.extui %6 : vector<8x4xi1> to vector<8x4xi32>
    %8 = arith.sitofp %7 : vector<8x4xi32> to vector<8x4xf32>
    %c0_3 = arith.constant 0 : index
    %c0_4 = arith.constant 0 : index
    %9 = vector.load %arg6[%c0_3, %c0_4] : memref<4x128xf32, #tpu.memory_space<vmem>>, vector<4x128xf32>
    %cst = arith.constant dense<0.000000e+00> : vector<8x128xf32>
    %10 = tpu.matmul %8, %9, %cst {dimension_numbers = #tpu.dot_dimension_numbers<[1], [0], [0], [1], [0, 0, 1, 1], [], []>} : vector<8x4xf32>, vector<4x128xf32>, vector<8x128xf32> -> vector<8x128xf32>
    %c0_5 = arith.constant 0 : index
    %c0_6 = arith.constant 0 : index
    %11 = vector.load %arg8[%c0_5, %c0_6] : memref<8x128xf32, #tpu.memory_space<vmem>>, vector<8x128xf32>
    %12 = arith.mulf %11, %10 : vector<8x128xf32>
    %c0_7 = arith.constant 0 : index
    %c0_8 = arith.constant 0 : index
    %c0_9 = arith.constant 0 : index
    %13 = vector.load %arg7[%c0_7, %c0_8, %c0_9] : memref<1x8x128xf32, #tpu.memory_space<vmem>>, vector<1x8x128xf32>
    %14 = vector.shape_cast %13 : vector<1x8x128xf32> to vector<8x128xf32>
    %15 = vector.shape_cast %12 : vector<8x128xf32> to vector<1x8x128xf32>
    tpu.vector_store %arg7[%c0_7, %c0_8, %c0_9], %15 {strides = array<i32>} : memref<1x8x128xf32, #tpu.memory_space<vmem>>, vector<1x8x128xf32>,
    return
  }
  func.func @transform_0(%arg0: i32, %arg1: i32) -> (i32, i32, i32) {
    %c0_i32 = arith.constant 0 : i32
    %c0_i32_0 = arith.constant 0 : i32
    return %arg1, %arg0, %c0_i32 : i32, i32, i32
  }
  func.func @transform_1(%arg0: i32, %arg1: i32) -> (i32, i32) {
    %c0_i32 = arith.constant 0 : i32
    %c0_i32_0 = arith.constant 0 : i32
    %c0_i32_1 = arith.constant 0 : i32
    return %c0_i32, %c0_i32_0 : i32, i32
  }
  func.func @transform_2(%arg0: i32, %arg1: i32) -> (i32, i32) {
    %c0_i32 = arith.constant 0 : i32
    %c0_i32_0 = arith.constant 0 : i32
    %c0_i32_1 = arith.constant 0 : i32
    return %c0_i32, %c0_i32_0 : i32, i32
  }
  func.func @transform_3(%arg0: i32, %arg1: i32) -> (i32, i32) {
    %c0_i32 = arith.constant 0 : i32
    %c0_i32_0 = arith.constant 0 : i32
    %c0_i32_1 = arith.constant 0 : i32
    return %c0_i32, %c0_i32_0 : i32, i32
  }
  func.func @transform_4(%arg0: i32, %arg1: i32) -> (i32, i32) {
    %c0_i32 = arith.constant 0 : i32
    %c0_i32_0 = arith.constant 0 : i32
    %c0_i32_1 = arith.constant 0 : i32
    return %c0_i32, %c0_i32_0 : i32, i32
  }
  func.func @transform_5(%arg0: i32, %arg1: i32) -> (i32, i32, i32) {
    %c0_i32 = arith.constant 0 : i32
    %c0_i32_0 = arith.constant 0 : i32
    return %arg1, %arg0, %c0_i32 : i32, i32, i32
  }
}

</mosaic_0001>

<llo_original>
// kernel: tpu_custom_call.1
$region0: #{tpu_custom_call.1}
  #allocation0 [shape = 'u32[]', space=smem, size = 0x4, offset = 0x4, fixed_abs, tag = 'smem constant byte address 0x4 - core index']
  #allocation1 [shape = 'u32[144,128]{1,0:T(1,128)}', space=vmem, size = 0x12000, scoped, tag = 'internal scratch']
  #allocation2 [shape = 'f32[8,128]{1,0:T(8,128)}', space=vmem, size = 0x1000, scoped, tag = 'scratch operand']
  %s0 = inlined_call_operand.vmem [shape: s32[2,8,4], index: 0, kind: input, shape index: {}]
  %s1 = inlined_call_operand.vmem [shape: f32[1,128], index: 1, kind: input, shape index: {}]
  %s2 = inlined_call_operand.vmem [shape: f32[1,128], index: 2, kind: input, shape index: {}]
  %s3 = inlined_call_operand.vmem [shape: f32[1,128], index: 3, kind: input, shape index: {}]
  %s4 = inlined_call_operand.vmem [shape: f32[4,128], index: 4, kind: input, shape index: {}]
  %s5 = inlined_call_operand.hbm [shape: f32[2,8,128], index: 5, kind: output, shape index: {}]
  %s6 = sld [smem:[#allocation0]]
  $region57: #{tpu_custom_call.1} parent=0
    _
  %s8 = ssub.s32 1, %s6
  %s9 = scalar_select 0, %s8, %s6
  $region1: #{tpu_custom_call.1} parent=0
    #allocation3 [shape = 'u8[8192]{0}', space=vmem, size = 0x2000, scoped, tag = 'output window, operand 0']
    #allocation4 [shape = 's32[2]{0}', space=sflag, size = 0x8, scoped, tag = 'scoped memory for tpu_custom_call.1']
    %10 = vsyncpa [#allocation4], 0
    %s11 = scalar_lea.sflag [#allocation4], 1
    %12 = vsyncpa %s11, 0
    loop: start=0, step=1, limit=4
    $region2: #{tpu_custom_call.1} parent=1 // loop_pre_header
      _
    $region3: #{tpu_custom_call.1} parent=1 // loop_header
      %s14 = sphi 0, %s18
      %p15 = scmp.ge.s32.totalorder %s14, 4
      %s21 = sphi 0, %s33
      %s22 = sphi 0, %s29
      %s23 = sphi 0, %s21
      %s24 = sphi 0, %s22
      %s25 = sphi 0, %s23
      %s26 = sphi 0, %s24
      %s38 = sphi 0, %s40
      %s41 = sphi 0, %s38
      %s42 = sphi 0, %s41
      %s58 = sphi 0, %s42
      %s62 = sphi 0, %s62
      %s64 = sphi 0, %s62
      %s65 = sphi 0, %s64
      %s79 = sphi 0, %s65
      %s83 = sphi 0, %s83
      %s85 = sphi 0, %s83
      %s86 = sphi 0, %s85
      %s100 = sphi 0, %s86
      %s104 = sphi 0, %s104
      %s106 = sphi 0, %s104
      %s107 = sphi 0, %s106
      %s121 = sphi 0, %s107
      %s125 = sphi 0, %s125
      %s127 = sphi 0, %s125
      %s128 = sphi 0, %s127
      %s142 = sphi 0, %s128
      %s150 = sphi 0, %s152
      %s153 = sphi 0, %s150
      %s154 = sphi 0, %s153
      %s170 = sphi 0, %s154
    $region4: #{tpu_custom_call.1} parent=1 // loop_header_branch
      %17 = sbr.rel (%p15) target = $region8
    $region5: #{tpu_custom_call.1} parent=1 // loop_body
      %s19 = ssub.s32 %s14, 1
      %s20 = ssub.s32 %s14, 2
      %s27 = sadd.s32 1, %s22
      %p28 = scmp.ge.s32.totalorder %s27, 2
      %s29 = scalar_select %p28, 0, %s27
      %s30 = sadd.s32 1, %s21
      %s31 = scalar_select %p28, %s30, %s21
      %p32 = scmp.ge.s32.totalorder %s31, 1
      %s33 = scalar_select %p32, 0, %s31
      %s34 = ssub.s32 %s22, %s29
      %s35 = ssub.s32 %s21, %s33
      %s36 = sor.u32 %s34, %s35
      %p37 = scmp.eq.s32.totalorder %s36, 0
      %s39 = sadd.s32 %s38, 1
      %s40 = scalar_select %p37, %s38, %s39
      %p43 = pneg %p37
      %p44 = scmp.eq.s32.totalorder %s14, 1
      %p45 = por %p43, %p44
      %p46 = scmp.ne.s32.totalorder %s38, %s41
      %p47 = scmp.eq.s32.totalorder %s14, 0
      %p48 = por %p46, %p47
      %p49 = scmp.ne.s32.totalorder %s38, %s41
      %p50 = scmp.eq.s32.totalorder %s19, 1
      %p51 = por %p49, %p50
      %p52 = scmp.ne.s32.totalorder %s41, %s42
      %p53 = scmp.eq.s32.totalorder %s19, 0
      %p54 = por %p52, %p53
      %p55 = scmp.ne.s32.totalorder %s41, %s42
      %p56 = scmp.eq.s32.totalorder %s20, 1
      %p57 = por %p55, %p56
      %p59 = scmp.ne.s32.totalorder %s42, %s58
      %p60 = scmp.eq.s32.totalorder %s20, 0
      %p61 = por %p59, %p60
      %s63 = sadd.s32 %s62, 1
      %p66 = scmp.eq.s32.totalorder %s14, 1
      %p67 = scmp.ne.s32.totalorder %s62, %s64
      %p68 = scmp.eq.s32.totalorder %s14, 0
      %p69 = por %p67, %p68
      %p70 = scmp.ne.s32.totalorder %s62, %s64
      %p71 = scmp.eq.s32.totalorder %s19, 1
      %p72 = por %p70, %p71
      %p73 = scmp.ne.s32.totalorder %s64, %s65
      %p74 = scmp.eq.s32.totalorder %s19, 0
      %p75 = por %p73, %p74
      %p76 = scmp.ne.s32.totalorder %s64, %s65
      %p77 = scmp.eq.s32.totalorder %s20, 1
      %p78 = por %p76, %p77
      %p80 = scmp.ne.s32.totalorder %s65, %s79
      %p81 = scmp.eq.s32.totalorder %s20, 0
      %p82 = por %p80, %p81
      %s84 = sadd.s32 %s83, 1
      %p87 = scmp.eq.s32.totalorder %s14, 1
      %p88 = scmp.ne.s32.totalorder %s83, %s85
      %p89 = scmp.eq.s32.totalorder %s14, 0
      %p90 = por %p88, %p89
      %p91 = scmp.ne.s32.totalorder %s83, %s85
      %p92 = scmp.eq.s32.totalorder %s19, 1
      %p93 = por %p91, %p92
      %p94 = scmp.ne.s32.totalorder %s85, %s86
      %p95 = scmp.eq.s32.totalorder %s19, 0
      %p96 = por %p94, %p95
      %p97 = scmp.ne.s32.totalorder %s85, %s86
      %p98 = scmp.eq.s32.totalorder %s20, 1
      %p99 = por %p97, %p98
      %p101 = scmp.ne.s32.totalorder %s86, %s100
      %p102 = scmp.eq.s32.totalorder %s20, 0
      %p103 = por %p101, %p102
      %s105 = sadd.s32 %s104, 1
      %p108 = scmp.eq.s32.totalorder %s14, 1
      %p109 = scmp.ne.s32.totalorder %s104, %s106
      %p110 = scmp.eq.s32.totalorder %s14, 0
      %p111 = por %p109, %p110
      %p112 = scmp.ne.s32.totalorder %s104, %s106
      %p113 = scmp.eq.s32.totalorder %s19, 1
      %p114 = por %p112, %p113
      %p115 = scmp.ne.s32.totalorder %s106, %s107
      %p116 = scmp.eq.s32.totalorder %s19, 0
      %p117 = por %p115, %p116
      %p118 = scmp.ne.s32.totalorder %s106, %s107
      %p119 = scmp.eq.s32.totalorder %s20, 1
      %p120 = por %p118, %p119
      %p122 = scmp.ne.s32.totalorder %s107, %s121
      %p123 = scmp.eq.s32.totalorder %s20, 0
      %p124 = por %p122, %p123
      %s126 = sadd.s32 %s125, 1
      %p129 = scmp.eq.s32.totalorder %s14, 1
      %p130 = scmp.ne.s32.totalorder %s125, %s127
      %p131 = scmp.eq.s32.totalorder %s14, 0
      %p132 = por %p130, %p131
      %p133 = scmp.ne.s32.totalorder %s125, %s127
      %p134 = scmp.eq.s32.totalorder %s19, 1
      %p135 = por %p133, %p134
      %p136 = scmp.ne.s32.totalorder %s127, %s128
      %p137 = scmp.eq.s32.totalorder %s19, 0
      %p138 = por %p136, %p137
      %p139 = scmp.ne.s32.totalorder %s127, %s128
      %p140 = scmp.eq.s32.totalorder %s20, 1
      %p141 = por %p139, %p140
      %p143 = scmp.ne.s32.totalorder %s128, %s142
      %p144 = scmp.eq.s32.totalorder %s20, 0
      %p145 = por %p143, %p144
      %s146 = ssub.s32 %s22, %s29
      %s147 = ssub.s32 %s21, %s33
      %s148 = sor.u32 %s146, %s147
      %p149 = scmp.eq.s32.totalorder %s148, 0
      %s151 = sadd.s32 %s150, 1
      %s152 = scalar_select %p149, %s150, %s151
      %p155 = pneg %p149
      %p156 = scmp.eq.s32.totalorder %s14, 1
      %p157 = por %p155, %p156
      %p158 = scmp.ne.s32.totalorder %s150, %s153
      %p159 = scmp.eq.s32.totalorder %s14, 0
      %p160 = por %p158, %p159
      %p161 = scmp.ne.s32.totalorder %s150, %s153
      %p162 = scmp.eq.s32.totalorder %s19, 1
      %p163 = por %p161, %p162
      %p164 = scmp.ne.s32.totalorder %s153, %s154
      %p165 = scmp.eq.s32.totalorder %s19, 0
      %p166 = por %p164, %p165
      %p167 = scmp.ne.s32.totalorder %s153, %s154
      %p168 = scmp.eq.s32.totalorder %s20, 1
      %p169 = por %p167, %p168
      %p171 = scmp.ne.s32.totalorder %s154, %s170
      %p172 = scmp.eq.s32.totalorder %s20, 0
      %p173 = por %p171, %p172
      %p174 = scmp.le.s32.totalorder 1, %s14
      %p175 = scmp.lt.s32.totalorder %s14, 3
      %p176 = pnand %p174, %p175
      %p177 = pneg %p176
      // Predicated region
      $region9: #{tpu_custom_call.1} parent=5 // pred_check
        _
      $region10: #{tpu_custom_call.1} parent=5 // pred_check_branch
        %179 = sbr.rel (%p176) target = $region12
      $region11: #{tpu_custom_call.1} parent=5 // pred_region
        %s180 = ssub.s32 %s14, 1
        // Predicated region
        $region13: #{tpu_custom_call.1} parent=11 // pred_check
          %p181 = pneg %p75
        $region14: #{tpu_custom_call.1} parent=11 // pred_check_branch
          %183 = sbr.rel (%p181) target = $region16
        $region15: #{tpu_custom_call.1} parent=11 // pred_region
          _
        $region16: #{tpu_custom_call.1} parent=11 // pred_fallthru
          _
        // Predicated region
        $region17: #{tpu_custom_call.1} parent=11 // pred_check
          %p184 = pneg %p96
        $region18: #{tpu_custom_call.1} parent=11 // pred_check_branch
          %186 = sbr.rel (%p184) target = $region20
        $region19: #{tpu_custom_call.1} parent=11 // pred_region
          _
        $region20: #{tpu_custom_call.1} parent=11 // pred_fallthru
          _
        // Predicated region
        $region21: #{tpu_custom_call.1} parent=11 // pred_check
          %p187 = pneg %p117
        $region22: #{tpu_custom_call.1} parent=11 // pred_check_branch
          %189 = sbr.rel (%p187) target = $region24
        $region23: #{tpu_custom_call.1} parent=11 // pred_region
          _
        $region24: #{tpu_custom_call.1} parent=11 // pred_fallthru
          _
        // Predicated region
        $region25: #{tpu_custom_call.1} parent=11 // pred_check
          %p190 = pneg %p138
        $region26: #{tpu_custom_call.1} parent=11 // pred_check_branch
          %192 = sbr.rel (%p190) target = $region28
        $region27: #{tpu_custom_call.1} parent=11 // pred_region
          _
        $region28: #{tpu_custom_call.1} parent=11 // pred_fallthru
          _
      $region12: #{tpu_custom_call.1} parent=5 // pred_fallthru
        _
      %p193 = scmp.lt.s32.totalorder %s14, 2
      // Predicated region
      $region29: #{tpu_custom_call.1} parent=5 // pred_check
        %p194 = pneg %p193
      $region30: #{tpu_custom_call.1} parent=5 // pred_check_branch
        %196 = sbr.rel (%p194) target = $region32
      $region31: #{tpu_custom_call.1} parent=5 // pred_region
        // Predicated region
        $region33: #{tpu_custom_call.1} parent=31 // pred_check
          %p197 = pneg %p48
        $region34: #{tpu_custom_call.1} parent=31 // pred_check_branch
          %199 = sbr.rel (%p197) target = $region36
        $region35: #{tpu_custom_call.1} parent=31 // pred_region
          %p200 = scmp.lt.s32.totalorder %s22, 1
          %s201 = scalar_select %p200, %s22, 1
          %p202 = scmp.lt.s32.totalorder %s21, 0
          %s203 = scalar_select %p202, %s21, 0
          %s204 = sadd.s32 %s203, %s201
          %s205 = smul.addr %s204, 8
          %s206 = scalar_lea.vmem %s0, %s205
        $region36: #{tpu_custom_call.1} parent=31 // pred_fallthru
          _
      $region32: #{tpu_custom_call.1} parent=5 // pred_fallthru
        _
      %p207 = scmp.le.s32.totalorder 1, %s14
      %p208 = scmp.lt.s32.totalorder %s14, 3
      %p209 = pnand %p207, %p208
      %p210 = pneg %p209
      // Predicated region
      $region37: #{tpu_custom_call.1} parent=5 // pred_check
        _
      $region38: #{tpu_custom_call.1} parent=5 // pred_check_branch
        %212 = sbr.rel (%p209) target = $region40
      $region39: #{tpu_custom_call.1} parent=5 // pred_region
        %s213 = ssub.s32 %s14, 1
        %p214 = scmp.lt.s32.totalorder %s24, 1
        %s215 = scalar_select %p214, %s24, 1
        %p216 = scmp.lt.s32.totalorder %s23, 0
        %s217 = scalar_select %p216, %s23, 0
        %s218 = sadd.s32 %s217, %s215
        %s219 = smul.addr %s218, 8
        %s220 = scalar_lea.vmem %s0, %s219
        %p221 = pneg %p54
        %p222 = pneg %p51
        %p223 = pneg %p75
        %p224 = pneg %p72
        %p225 = pneg %p96
        %p226 = pneg %p93
        %p227 = pneg %p117
        %p228 = pneg %p114
        %p229 = pneg %p138
        %p230 = pneg %p135
        %p231 = pneg %p166
        %p232 = pneg %p163
        %s233 = sand.u32 %s153, 1
        %s234 = scalar_lea.sflag [#allocation4], %s233
        %s235 = sand.u32 %s153, 1
        %s236 = smul.addr %s235, 8
        %s237 = scalar_lea.vmem [#allocation3], %s236
        %p238 = scmp.lt.s32.totalorder %s24, 1
        %s239 = scalar_select %p238, %s24, 1
        %p240 = scmp.lt.s32.totalorder %s23, 0
        %s241 = scalar_select %p240, %s23, 0
        %s242 = sadd.s32 %s241, %s239
        %s243 = smul.addr %s242, 8
        %s244 = scalar_lea.vmem %s0, %s243
        %p245 = scmp.eq.s32.totalorder %s24, 0
        // Predicated region
        $region41: #{tpu_custom_call.1} parent=39 // pred_check
          %p246 = pneg %p245
        $region42: #{tpu_custom_call.1} parent=39 // pred_check_branch
          %248 = sbr.rel (%p246) target = $region44
        $region43: #{tpu_custom_call.1} parent=39 // pred_region
          %v249 = vlaneseq
          %v250 = vshrl.u32 %v249, 7
          %s251 = smul.u32 %s23, 8
          %v252 = vstv %s251
          %v253 = vadd.s32 %v250, %v252
          %v254 = vmul.u32 %v253, 4
          %v255 = vcvt.s32.f32 %v254
          %v256 = vld [vmem:[%s1] sm:$0x1]
          %v258 = vlaneseq
          %v259 = vshrl.u32 %v258, 7
          %v260 = vsub.s32 0, %v259
          %v261 = vrot.slane %v256, %v260
          %v263 = vadd.f32 %v255, %v261
          %v264 = vld [vmem:[%s2] sm:$0x1]
          %v266 = vlaneseq
          %v267 = vshrl.u32 %v266, 7
          %v268 = vsub.s32 0, %v267
          %v269 = vrot.slane %v264, %v268
          %v271 = vmul.f32 %v263, %v269
          %v272 = vld [vmem:[%s3] sm:$0x1]
          %v274 = vlaneseq
          %v275 = vshrl.u32 %v274, 7
          %v276 = vsub.s32 0, %v275
          %v277 = vrot.slane %v272, %v276
          %v279 = vadd.f32 %v271, %v277
          %v280 = vand.u32 2147483647, %v279
          %vm281 = vcmp.le.f32.partialorder %v280, 0.7853982
          %vm282 = vcmp.lt.s32.totalorder %v279, 0
          %v283 = vand.u32 %v279, 2139095040
          %v284 = vshrl.u32 %v283, 23
          %v285 = vsub.s32 %v284, 127
          %v286 = vand.u32 2147483647, %v279
          %v287 = vand.u32 %v286, 8388607
          %v288 = vor.u32 %v287, 8388608
          %v289 = vsub.s32 0, %v288
          %v290 = vadd.s32 %v285, 1
          %vm291 = vcmp.gt.s32.totalorder %v290, 0
          %v292 = vsel %vm291, %v290, 0
          %v293 = vshrl.u32 %v292, 5
          %v294 = vand.u32 %v292, 31
          %v295 = vsub.s32 32, %v294
          %v296 = vshrl.u32 683565275, %v295
          %v297 = vshll.u32 683565275, %v294
          %v298 = vshrl.u32 2475754826, %v295
          %v299 = vor.u32 %v297, %v298
          %v300 = vshll.u32 2475754826, %v294
          %v301 = vshrl.u32 2131351028, %v295
          %v302 = vor.u32 %v300, %v301
          %v303 = vshll.u32 2131351028, %v294
          %v304 = vshrl.u32 2102212464, %v295
          %v305 = vor.u32 %v303, %v304
          %v306 = vshll.u32 2102212464, %v294
          %v307 = vshrl.u32 920167782, %v295
          %v308 = vor.u32 %v306, %v307
          %v309 = vshll.u32 920167782, %v294
          %v310 = vshrl.u32 1326507024, %v295
          %v311 = vor.u32 %v309, %v310
          %vm312 = vcmp.lt.s32.totalorder %v293, 1
          %vm313 = vcmp.lt.s32.totalorder %v293, 2
          %vm314 = vcmp.lt.s32.totalorder %v293, 3
          %vm315 = vcmp.lt.s32.totalorder %v293, 4
          %v316 = vsel %vm312, %v296, %v299
          %v317 = vsel %vm315, %v305, 2102212464
          %v318 = vsel %vm314, %v302, %v317
          %v319 = vsel %vm313, %v316, %v318
          %v320 = vsel %vm312, %v299, %v302
          %v321 = vsel %vm315, %v308, 920167782
          %v322 = vsel %vm314, %v305, %v321
          %v323 = vsel %vm313, %v320, %v322
          %v324 = vsel %vm312, %v302, %v305
          %v325 = vsel %vm315, %v311, 1326507024
          %v326 = vsel %vm314, %v308, %v325
          %v327 = vsel %vm313, %v324, %v326
          %v328 = vshll.u32 %v288, 8
          %v329 = vmul.u32.u64.compose %v328, %v327
          %v330 = vextract.low.u32 %v329
          %v331 = vextract.high.u32 %v329
          %v332 = vmul.u32.u64.compose %v328, %v323
          %v333 = vextract.low.u32 %v332
          %v334 = vextract.high.u32 %v332
          %v335 = vmul.u32 %v328, %v319
          %v336 = vadd.s32 %v331, %v333
          %vm337 = vc.u32 %v331, %v333
          %v338 = vadd.s32 %v334, 1
          %v339 = vsel %vm337, %v338, %v334
          %v340 = vadd.s32 %v335, %v339
          %v341 = vadd.s32 %v340, 536870912
          %v342 = vshrl.u32 %v341, 30
          %v343 = vshll.u32 %v342, 30
          %v344 = vsub.s32 %v340, %v343
          %vm345 = vcmp.lt.s32.totalorder %v344, 0
          %v346 = vsub.s32 0, %v344
          %v347 = vsel %vm345, %v346, %v344
          %v348 = vclz %v347
          %v349 = vsub.s32 %v348, 2
          %vm350 = vcmp.gt.s32.totalorder 0, %v349
          %v351 = vsel %vm350, 0, %v349
          %v352 = vsub.s32 32, %v351
          %v353 = vshll.u32 %v344, %v351
          %v354 = vshrl.u32 %v336, %v352
          %v355 = vor.u32 %v353, %v354
          %v356 = vsub.s32 4294967266, %v351
          %v357 = vadd.s32 %v356, 127
          %v358 = vshll.u32 %v357, 23
          %v359 = vor.u32 4788187, %v358
          %v360 = vand.u32 2147483647, %v359
          %v362 = vcvt.s32.f32 %v355
          %v363 = vmul.f32 %v362, %v360
          %v364 = vxor.u32 %v363, 2147483648
          %v365 = vsel %vm282, %v364, %v363
          %v366 = vsub.s32 4, %v342
          %v367 = vsel %vm282, %v366, %v342
          %v368 = vsel %vm281, %v279, %v365
          %v369 = vsel %vm281, 0, %v367
          %v370 = vcosq.f32.pop %v368
          %v371 = vsinq.f32.pop %v368
          %vm372 = vweird.f32 %v279
          %v373 = vadd.s32 %v369, 3
          %v374 = vand.u32 %v373, 3
          %vm375 = vcmp.lt.s32.totalorder %v374, 2
          %vm376 = vcmp.eq.s32.totalorder %v374, 0
          %v377 = vxor.u32 %v371, 2147483648
          %v378 = vsel %vm376, %v370, %v377
          %vm379 = vcmp.eq.s32.totalorder %v374, 2
          %v380 = vxor.u32 %v370, 2147483648
          %v381 = vsel %vm379, %v380, %v371
          %v382 = vsel %vm375, %v378, %v381
          %v383 = vsel %vm372, nan, %v382
          %384 = vst [vmem:[#allocation2] sm:$0xff] %v383
        $region44: #{tpu_custom_call.1} parent=39 // pred_fallthru
          _
        %v385 = vld [vmem:[%s244] sm:$0xff]
        %vm386 = vcmp.ne.s32.totalorder %v385, 1
        %v387 = vsel %vm386, 1, 0
        %v388 = vcvt.s32.f32 %v387
        %v389 = vld [vmem:[%s4] sm:$0xf]
        %vm390 = vcmask 31744
        %v392 = vsel %vm390, %v388, 0
        %vm394 = vcmask 1043456
        %v396 = vsel %vm394, %v389, 0
        %398 = vmatprep.subr.mxu0 0.0
        %399 = vmatpush1.msra.mxu0 %v396
        %400 = vmatprep.subr.mxu0 0.0
        %401 = vmatpush1.msra.mxu0 0.0
        %402 = vmatprep.subr.mxu0 0.0
        %403 = vmatpush1.msra.mxu0 0.0
        %404 = vmatprep.subr.mxu0 0.0
        %405 = vmatpush1.msra.mxu0 0.0
        %406 = vmatprep.subr.mxu0 0.0
        %407 = vmatpush1.msra.mxu0 0.0
        %408 = vmatprep.subr.mxu0 0.0
        %409 = vmatpush1.msra.mxu0 0.0
        %410 = vmatprep.subr.mxu0 0.0
        %411 = vmatpush1.msra.mxu0 0.0
        %412 = vmatprep.subr.mxu0 0.0
        %413 = vmatpush1.msra.mxu0 0.0
        %414 = vmatprep.subr.mxu0 0.0
        %415 = vmatpush1.msra.mxu0 0.0
        %416 = vmatprep.subr.mxu0 0.0
        %417 = vmatpush1.msra.mxu0 0.0
        %418 = vmatprep.subr.mxu0 0.0
        %419 = vmatpush1.msra.mxu0 0.0
        %420 = vmatprep.subr.mxu0 0.0
        %421 = vmatpush1.msra.mxu0 0.0
        %422 = vmatprep.subr.mxu0 0.0
        %423 = vmatpush1.msra.mxu0 0.0
        %424 = vmatprep.subr.mxu0 0.0
        %425 = vmatpush1.msra.mxu0 0.0
        %426 = vmatprep.subr.mxu0 0.0
        %427 = vmatpush1.msra.mxu0 0.0
        %428 = vmatprep.subr.mxu0 0.0
        %429 = vmatpush1.msra.mxu0 0.0
        %430 = vmatprep.subr.mxu0 0.0
        %431 = vmatpush1.msra.mxu0 0.0
        %432 = vmatprep.subr.mxu0 0.0
        %433 = vmatpush1.msra.mxu0 0.0
        %434 = vmatprep.subr.mxu0 0.0
        %435 = vmatpush1.msra.mxu0 0.0
        %436 = vmatprep.subr.mxu0 0.0
        %437 = vmatpush1.msra.mxu0 0.0
        %438 = vmatprep.subr.mxu0 0.0
        %439 = vmatpush1.msra.mxu0 0.0
        %440 = vmatprep.subr.mxu0 0.0
        %441 = vmatpush1.msra.mxu0 0.0
        %442 = vmatprep.subr.mxu0 0.0
        %443 = vmatpush1.msra.mxu0 0.0
        %444 = vmatprep.subr.mxu0 0.0
        %445 = vmatpush1.msra.mxu0 0.0
        %446 = vmatprep.subr.mxu0 0.0
        %447 = vmatpush1.msra.mxu0 0.0
        %448 = vmatprep.subr.mxu0 0.0
        %449 = vmatpush1.msra.mxu0 0.0
        %450 = vmatprep.subr.mxu0 0.0
        %451 = vmatpush1.msra.mxu0 0.0
        %452 = vmatprep.subr.mxu0 0.0
        %453 = vmatpush1.msra.mxu0 0.0
        %454 = vmatprep.subr.mxu0 0.0
        %455 = vmatpush1.msra.mxu0 0.0
        %456 = vmatprep.subr.mxu0 0.0
        %457 = vmatpush1.msra.mxu0 0.0
        %458 = vmatprep.subr.mxu0 0.0
        %459 = vmatpush1.msra.mxu0 0.0
        %460 = vmatprep.subr.mxu0 0.0
        %461 = vmatpush1.msra.mxu0 0.0
        %462 = vmatprep.mubr.f32.mxu0 0.0
        %463 = vmatmul.mubr.f32.gmra.mrb[0].mxu0 %v392
        %v464 = vpop.f32.mrb[0].mxu0
        %v465 = vadd.f32 0.0, %v464
        %v466 = vpop.f32.mrb[0].mxu0
        %467 = vdwg.mxu0
        %v468 = vld [vmem:[#allocation2] sm:$0xff]
        %v469 = vmul.f32 %v468, %v465
        %470 = vst [vmem:[%s237] sm:$0xff] %v469
        %s471 = sand.u32 %s153, 1
        %s472 = scalar_lea.sflag [#allocation4], %s471
        %s473 = sand.u32 %s153, 1
        %s474 = smul.addr %s473, 8
        %s475 = scalar_lea.vmem [#allocation3], %s474
        // Predicated region
        $region45: #{tpu_custom_call.1} parent=39 // pred_check
          %p476 = pneg %p163
        $region46: #{tpu_custom_call.1} parent=39 // pred_check_branch
          %478 = sbr.rel (%p476) target = $region48
        $region47: #{tpu_custom_call.1} parent=39 // pred_region
          %s480 = ssub.s32 128, 128
          %481 = vsyncadd %s472, %s480
          %s482 = sadd.s32 %s23, %s24
          %s483 = smul.addr %s482, 128
          %s484 = scalar_lea.hbm %s5, %s483
          %s486 = sshll.u32 %s475, 4
          %s487 = int_to_ptr.vmem [resolvable:$true] %s486
          %489 = dma.vmem_to_hbm [thread:$0]  %s487, 128, %s484, %s472
        $region48: #{tpu_custom_call.1} parent=39 // pred_fallthru
          _
      $region40: #{tpu_custom_call.1} parent=5 // pred_fallthru
        _
      %p490 = scmp.le.s32.totalorder 2, %s14
      // Predicated region
      $region49: #{tpu_custom_call.1} parent=5 // pred_check
        %p491 = pneg %p490
      $region50: #{tpu_custom_call.1} parent=5 // pred_check_branch
        %493 = sbr.rel (%p491) target = $region52
      $region51: #{tpu_custom_call.1} parent=5 // pred_region
        %s494 = ssub.s32 %s14, 2
        // Predicated region
        $region53: #{tpu_custom_call.1} parent=51 // pred_check
          %p495 = pneg %p169
        $region54: #{tpu_custom_call.1} parent=51 // pred_check_branch
          %497 = sbr.rel (%p495) target = $region56
        $region55: #{tpu_custom_call.1} parent=51 // pred_region
          %s498 = sand.u32 %s154, 1
          %s499 = scalar_lea.sflag [#allocation4], %s498
          %s500 = sand.u32 %s154, 1
          %s501 = smul.addr %s500, 8
          %s502 = scalar_lea.vmem [#allocation3], %s501
          %503 = dma.done %s499, 128
        $region56: #{tpu_custom_call.1} parent=51 // pred_fallthru
          _
      $region52: #{tpu_custom_call.1} parent=5 // pred_fallthru
        _
    $region6: #{tpu_custom_call.1} parent=1 // loop_footer
      %s18 = sadd.s32 1, %s14
    $region7: #{tpu_custom_call.1} parent=1 // loop_footer_branch
      %13 = sbr.rel target = $region3
    $region8: #{tpu_custom_call.1} parent=1 // loop_exit
      _
    %504 = vsyncpa [#allocation4], 1
    %s505 = scalar_lea.sflag [#allocation4], 1
    %506 = vsyncpa %s505, 1

</llo_original>
